<compile_context>
chip_gen: v6e
topology: v6e:2x2x1
jax: 0.10.0
libtpu: 0.0.40
codegen_flags: <defaults>
</compile_context>

<pallas_src>
import functools

import jax
import jax.numpy as jnp
from jax import lax
from jax.experimental import pallas as pl
from jax.experimental.pallas import tpu as pltpu

VMEM = pl.BlockSpec(memory_space=pltpu.MemorySpace.VMEM)
SMEM = pl.BlockSpec(memory_space=pltpu.MemorySpace.SMEM)

# Accumulating (edge-reduction) grids must be sequential; raise the scoped
# VMEM limit above the 32 MiB default but stay under v7x's 64 MiB physical.
_ACC_PARAMS = pltpu.CompilerParams(
    dimension_semantics=("arbitrary",), vmem_limit_bytes=48 * 1024 * 1024)
_PAR_PARAMS = pltpu.CompilerParams(
    dimension_semantics=("parallel",), vmem_limit_bytes=48 * 1024 * 1024)


def _round_up(x, m):
    return (x + m - 1) // m * m


def _apply_act(y, act):
    if act == "none":
        return y
    if act == "relu":
        return jnp.maximum(y, 0.0)
    if act == "leaky":
        return jnp.where(y > 0, y, 0.01 * y)
    if act == "elu":
        return jnp.where(y > 0, y, jnp.exp(jnp.minimum(y, 0.0)) - 1.0)
    if act == "sigmoid":
        return 1.0 / (1.0 + jnp.exp(-y))
    raise ValueError(act)


# ----------------------------------------------------------------------------
# Small fused node-path kernels (whole-array: node dim is modest)
# ----------------------------------------------------------------------------
def _linear_kernel(x_ref, w_ref, b_ref, o_ref, *, act):
    y = jnp.dot(x_ref[...], w_ref[...], preferred_element_type=jnp.float32)
    y = y + b_ref[...]
    o_ref[...] = _apply_act(y, act).astype(o_ref.dtype)


def _batchnorm_kernel(x_ref, g_ref, b_ref, o_ref, *, eps):
    x = x_ref[...]
    mu = jnp.mean(x, axis=0, keepdims=True)
    var = jnp.mean((x - mu) ** 2, axis=0, keepdims=True)
    o_ref[...] = (x - mu) * lax.rsqrt(var + eps) * g_ref[...] + b_ref[...]


def _proj_skip_kernel(x_ref, w_ref, b_ref, x1_ref, sw_ref, o_ref):
    # skip1 = skip_weight * proj_skip(x) + x1   (fused)
    p = jnp.dot(x_ref[...], w_ref[...], preferred_element_type=jnp.float32) + b_ref[...]
    o_ref[...] = sw_ref[0] * p + x1_ref[...]


def _final_mix_kernel(x1_ref, w_ref, b_ref, x5_ref, s_ref, o_ref):
    # xf_part = s * final_proj(x1) + (1 - s) * x5   (fused)
    s = s_ref[0]
    p = jnp.dot(x1_ref[...], w_ref[...], preferred_element_type=jnp.float32) + b_ref[...]
    o_ref[...] = s * p + (1.0 - s) * x5_ref[...]


def _node_mlp_kernel(x_ref, w1_ref, b1_ref, w2_ref, b2_ref, w3_ref, b3_ref, o_ref):
    # node_pred: Linear -> ELU -> Linear -> ELU -> Linear (dropouts = identity)
    h = jnp.dot(x_ref[...], w1_ref[...], preferred_element_type=jnp.float32) + b1_ref[...]
    h = _apply_act(h, "elu")
    h = jnp.dot(h, w2_ref[...], preferred_element_type=jnp.float32) + b2_ref[...]
    h = _apply_act(h, "elu")
    o_ref[...] = jnp.dot(h, w3_ref[...], preferred_element_type=jnp.float32) + b3_ref[...]


# ----------------------------------------------------------------------------
# Fused edge preprocessing (LayerNorm->MLP encoder  x  classifier gate)
# ----------------------------------------------------------------------------
def _edge_pre_kernel(ea_ref, lng_ref, lnb_ref, w1_ref, b1_ref, w2_ref, b2_ref,
                     cw1_ref, cb1_ref, cw2_ref, cb2_ref, o_ref, *, eps):
    ea = ea_ref[...]
    mu = jnp.mean(ea, axis=-1, keepdims=True)
    var = jnp.mean((ea - mu) ** 2, axis=-1, keepdims=True)
    a = (ea - mu) * lax.rsqrt(var + eps) * lng_ref[...] + lnb_ref[...]
    h = jnp.maximum(jnp.dot(a, w1_ref[...], preferred_element_type=jnp.float32) + b1_ref[...], 0.0)
    enc = jnp.dot(h, w2_ref[...], preferred_element_type=jnp.float32) + b2_ref[...]
    # classifier uses the raw edge_attr
    c = jnp.maximum(jnp.dot(ea, cw1_ref[...], preferred_element_type=jnp.float32) + cb1_ref[...], 0.0)
    logit = jnp.dot(c, cw2_ref[...], preferred_element_type=jnp.float32) + cb2_ref[...]
    gate = 1.0 / (1.0 + jnp.exp(-logit))
    o_ref[...] = enc * gate


# ----------------------------------------------------------------------------
# GATv2 pass 1: per-edge logits / x_j  +  online per-head softmax denominator
# ----------------------------------------------------------------------------
def _gat_edge_kernel(ssrc_ref, sdst_ref, ea_ref, xl_ref, xr_ref, we_ref, amat_ref,
                     logits_ref, xj_ref, lse_ref, gmax_sc, *, neg_slope):
    i = pl.program_id(0)

    @pl.when(i == 0)
    def _():
        lse_ref[...] = jnp.zeros_like(lse_ref)              # running denominator
        gmax_sc[...] = jnp.full_like(gmax_sc, -1e30)        # running per-head max

    ssrc = ssrc_ref[...]                                    # (TE, N) bf16 one-hot(src)
    sdst = sdst_ref[...]                                    # (TE, N) bf16 one-hot(dst)

    # gather node features via one-hot matmuls (bf16 MXU, f32 accumulate)
    xj = jnp.dot(ssrc, xl_ref[...], preferred_element_type=jnp.float32)   # (TE, H*C)
    xi = jnp.dot(sdst, xr_ref[...], preferred_element_type=jnp.float32)   # (TE, H*C)
    e = jnp.dot(ea_ref[...], we_ref[...], preferred_element_type=jnp.float32)  # lin_edge

    m = xj + xi + e
    m = jnp.where(m > 0, m, neg_slope * m)
    logits = jnp.dot(m, amat_ref[...], preferred_element_type=jnp.float32)  # (TE, H)

    logits_ref[...] = logits
    xj_ref[...] = xj.astype(xj_ref.dtype)

    # online (rescaled) accumulation of the per-destination softmax denominator
    gmax_old = gmax_sc[...]
    gmax_new = jnp.maximum(gmax_old, jnp.max(logits, axis=0, keepdims=True))
    gmax_sc[...] = gmax_new
    expl = jnp.exp(logits - gmax_new)                                       # (TE, H)
    contrib = lax.dot_general(sdst.astype(jnp.float32), expl,
                              (((0,), (0,)), ((), ())),
                              preferred_element_type=jnp.float32)           # (N, H) segment sum
    lse_ref[...] = lse_ref[...] * jnp.exp(gmax_old - gmax_new) + contrib

    @pl.when(i == pl.num_programs(0) - 1)
    def _():
        # finalize to log-sum-exp so pass 2 only needs one (N, H) tensor
        lse_ref[...] = gmax_sc[...] + jnp.log(lse_ref[...] + 1e-16)


# ----------------------------------------------------------------------------
# GATv2 pass 2: alpha, weighted scatter, + fused bias/LayerNorm/leaky epilogue
# ----------------------------------------------------------------------------
def _gat_agg_kernel(sdst_ref, logits_ref, xj_ref, lse_ref, bmat_ref, bias_ref,
                    g_ref, b_ref, alpha_ref, out_ref, *, eps):
    i = pl.program_id(0)

    @pl.when(i == 0)
    def _():
        out_ref[...] = jnp.zeros_like(out_ref)

    sdst = sdst_ref[...]                                                    # (TE, N) bf16
    # exact f32 gather of the per-destination log-sum-exp
    lse_e = jnp.dot(sdst.astype(jnp.float32), lse_ref[...],
                    preferred_element_type=jnp.float32)                     # (TE, H)
    alpha = jnp.exp(logits_ref[...] - lse_e)                                # (TE, H)
    alpha_ref[...] = alpha

    # expand per-head alpha across channels and scatter alpha * x_j to nodes
    alpha_full = jnp.dot(alpha, bmat_ref[...], preferred_element_type=jnp.float32)  # (TE, H*C)
    msg = (alpha_full * xj_ref[...].astype(jnp.float32)).astype(jnp.bfloat16)
    out_ref[...] += lax.dot_general(sdst, msg, (((0,), (0,)), ((), ())),
                                    preferred_element_type=jnp.float32)     # (N, H*C)

    @pl.when(i == pl.num_programs(0) - 1)
    def _():
        # epilogue: + bias, LayerNorm, leaky_relu (replaces a standalone kernel)
        y = out_ref[...] + bias_ref[...]
        mu = jnp.mean(y, axis=-1, keepdims=True)
        var = jnp.mean((y - mu) ** 2, axis=-1, keepdims=True)
        y = (y - mu) * lax.rsqrt(var + eps) * g_ref[...] + b_ref[...]
        out_ref[...] = jnp.where(y > 0, y, 0.01 * y)


def _scatter_mean_kernel(sdst_ref, e_ref, invdeg_ref, o_ref):
    i = pl.program_id(0)

    @pl.when(i == 0)
    def _():
        o_ref[...] = jnp.zeros_like(o_ref)

    # exact f32 segment sum (small feature width); degree precomputed outside
    o_ref[...] += lax.dot_general(sdst_ref[...].astype(jnp.float32), e_ref[...],
                                  (((0,), (0,)), ((), ())),
                                  preferred_element_type=jnp.float32)

    @pl.when(i == pl.num_programs(0) - 1)
    def _():
        o_ref[...] = o_ref[...] * invdeg_ref[...]


# ----------------------------------------------------------------------------
# Wrappers
# ----------------------------------------------------------------------------
def linear(x, w, b, act="none", out_dtype=jnp.float32):
    m, n = x.shape[0], w.shape[1]
    return pl.pallas_call(
        functools.partial(_linear_kernel, act=act),
        out_shape=jax.ShapeDtypeStruct((m, n), out_dtype),
        in_specs=[VMEM, VMEM, VMEM],
        out_specs=VMEM,
    )(x, w, b.reshape(1, -1))


def batchnorm(x, g, b, eps=1e-5):
    return pl.pallas_call(
        functools.partial(_batchnorm_kernel, eps=eps),
        out_shape=jax.ShapeDtypeStruct(x.shape, jnp.float32),
        in_specs=[VMEM, VMEM, VMEM],
        out_specs=VMEM,
    )(x, g.reshape(1, -1), b.reshape(1, -1))


def proj_skip(x, w, b, x1, skip_w):
    n, d = x.shape[0], w.shape[1]
    return pl.pallas_call(
        _proj_skip_kernel,
        out_shape=jax.ShapeDtypeStruct((n, d), jnp.float32),
        in_specs=[VMEM, VMEM, VMEM, VMEM, SMEM],
        out_specs=VMEM,
    )(x, w, b.reshape(1, -1), x1, skip_w)


def final_mix(x1, w, b, x5, alpha_param):
    n, d = x1.shape[0], w.shape[1]
    s = jax.nn.sigmoid(alpha_param)          # (1,) scalar, goes to SMEM
    return pl.pallas_call(
        _final_mix_kernel,
        out_shape=jax.ShapeDtypeStruct((n, d), jnp.float32),
        in_specs=[VMEM, VMEM, VMEM, VMEM, SMEM],
        out_specs=VMEM,
    )(x1, w, b.reshape(1, -1), x5, s)


def node_pred(xf, p):
    n = xf.shape[0]
    return pl.pallas_call(
        _node_mlp_kernel,
        out_shape=jax.ShapeDtypeStruct((n, 1), jnp.float32),
        in_specs=[VMEM] * 7,
        out_specs=VMEM,
    )(xf, p["np_w1"], p["np_b1"].reshape(1, -1), p["np_w2"], p["np_b2"].reshape(1, -1),
      p["np_w3"], p["np_b3"].reshape(1, -1))


def edge_preprocess(edge_attr, p, te):
    e_pad, ed = edge_attr.shape
    od2 = p["ee_w1"].shape[1]
    od = p["ee_w2"].shape[1]
    ed2 = p["ec_w1"].shape[1]
    n_tiles = e_pad // te
    cmap = lambda i: (0, 0)
    return pl.pallas_call(
        functools.partial(_edge_pre_kernel, eps=1e-5),
        grid=(n_tiles,),
        in_specs=[
            pl.BlockSpec((te, ed), lambda i: (i, 0)),
            pl.BlockSpec((1, ed), cmap), pl.BlockSpec((1, ed), cmap),
            pl.BlockSpec((ed, od2), cmap), pl.BlockSpec((1, od2), cmap),
            pl.BlockSpec((od2, od), cmap), pl.BlockSpec((1, od), cmap),
            pl.BlockSpec((ed, ed2), cmap), pl.BlockSpec((1, ed2), cmap),
            pl.BlockSpec((ed2, 1), cmap), pl.BlockSpec((1, 1), cmap),
        ],
        out_specs=pl.BlockSpec((te, od), lambda i: (i, 0)),
        out_shape=jax.ShapeDtypeStruct((e_pad, od), jnp.float32),
        compiler_params=_PAR_PARAMS,
    )(edge_attr, p["ee_ln_g"].reshape(1, -1), p["ee_ln_b"].reshape(1, -1),
      p["ee_w1"], p["ee_b1"].reshape(1, -1), p["ee_w2"], p["ee_b2"].reshape(1, -1),
      p["ec_w1"], p["ec_b1"].reshape(1, -1), p["ec_w2"], p["ec_b2"].reshape(1, -1))


def scatter_mean(sdst, e_enc, inv_deg, te):
    e_pad, n = sdst.shape
    od = e_enc.shape[1]
    n_tiles = e_pad // te
    return pl.pallas_call(
        _scatter_mean_kernel,
        grid=(n_tiles,),
        in_specs=[
            pl.BlockSpec((te, n), lambda i: (i, 0)),
            pl.BlockSpec((te, od), lambda i: (i, 0)),
            pl.BlockSpec((n, 1), lambda i: (0, 0)),
        ],
        out_specs=pl.BlockSpec((n, od), lambda i: (0, 0)),
        out_shape=jax.ShapeDtypeStruct((n, od), jnp.float32),
        compiler_params=_ACC_PARAMS,
    )(sdst, e_enc, inv_deg)


def gatv2_layer(x, p, eattr_enc, ssrc, sdst, ln_g, ln_b, te, neg_slope=0.2):
    heads, c = p["heads"], p["out_ch"]
    hc = heads * c
    n = x.shape[0]
    e_pad, de = eattr_enc.shape
    n_tiles = e_pad // te

    # fused lin_l + lin_r: one (in, 2*H*C) matmul; outputs in bf16 for the
    # one-hot gather matmuls (f32 accumulation keeps the math stable).
    wlr = jnp.concatenate([p["wl"], p["wr"]], axis=1)
    blr = jnp.concatenate([p["bl"], p["br"]])
    xlr = linear(x, wlr, blr, out_dtype=jnp.bfloat16)
    xl, xr = xlr[:, :hc], xlr[:, hc:]

    # bmat[h, h*C + c] = 1 ;  amat[h*C + c, h] = att[h, c]
    bmat = jnp.kron(jnp.eye(heads, dtype=jnp.float32), jnp.ones((1, c), jnp.float32))
    amat = bmat.T * p["att"].reshape(-1)[:, None]

    logits, xj, lse = pl.pallas_call(
        functools.partial(_gat_edge_kernel, neg_slope=neg_slope),
        grid=(n_tiles,),
        in_specs=[
            pl.BlockSpec((te, n), lambda i: (i, 0)),      # ssrc tile (bf16)
            pl.BlockSpec((te, n), lambda i: (i, 0)),      # sdst tile (bf16)
            pl.BlockSpec((te, de), lambda i: (i, 0)),     # edge_attr_enc tile
            pl.BlockSpec((n, hc), lambda i: (0, 0)),      # xl (resident)
            pl.BlockSpec((n, hc), lambda i: (0, 0)),      # xr (resident)
            pl.BlockSpec((de, hc), lambda i: (0, 0)),     # lin_edge weight
            pl.BlockSpec((hc, heads), lambda i: (0, 0)),  # att matrix
        ],
        out_specs=(
            pl.BlockSpec((te, heads), lambda i: (i, 0)),  # logits (tiled)
            pl.BlockSpec((te, hc), lambda i: (i, 0)),     # x_j store (tiled, bf16)
            pl.BlockSpec((n, heads), lambda i: (0, 0)),   # lse accumulator
        ),
        out_shape=(
            jax.ShapeDtypeStruct((e_pad, heads), jnp.float32),
            jax.ShapeDtypeStruct((e_pad, hc), jnp.bfloat16),
            jax.ShapeDtypeStruct((n, heads), jnp.float32),
        ),
        scratch_shapes=[pltpu.VMEM((1, heads), jnp.float32)],
        compiler_params=_ACC_PARAMS,
    )(ssrc, sdst, eattr_enc, xl, xr, p["we"], amat)

    alpha, out = pl.pallas_call(
        functools.partial(_gat_agg_kernel, eps=1e-5),
        grid=(n_tiles,),
        in_specs=[
            pl.BlockSpec((te, n), lambda i: (i, 0)),      # sdst tile (bf16)
            pl.BlockSpec((te, heads), lambda i: (i, 0)),  # logits tile
            pl.BlockSpec((te, hc), lambda i: (i, 0)),     # x_j tile (bf16)
            pl.BlockSpec((n, heads), lambda i: (0, 0)),   # lse (resident)
            pl.BlockSpec((heads, hc), lambda i: (0, 0)),  # head -> channel expander
            pl.BlockSpec((1, hc), lambda i: (0, 0)),      # GAT bias
            pl.BlockSpec((1, hc), lambda i: (0, 0)),      # LN gamma
            pl.BlockSpec((1, hc), lambda i: (0, 0)),      # LN beta
        ],
        out_specs=(
            pl.BlockSpec((te, heads), lambda i: (i, 0)),  # alpha (tiled)
            pl.BlockSpec((n, hc), lambda i: (0, 0)),      # node output accumulator
        ),
        out_shape=(
            jax.ShapeDtypeStruct((e_pad, heads), jnp.float32),
            jax.ShapeDtypeStruct((n, hc), jnp.float32),
        ),
        compiler_params=_ACC_PARAMS,
    )(sdst, logits, xj, lse, bmat, p["bias"].reshape(1, -1),
      ln_g.reshape(1, -1), ln_b.reshape(1, -1))
    return out, alpha


# ----------------------------------------------------------------------------
# Model parameters + forward
# ----------------------------------------------------------------------------
def init_params(key, indim, outdim, edge_dim, heads):
    keys = iter(jax.random.split(key, 80))

    def w(shape, scale=0.1):
        return (scale * jax.random.normal(next(keys), shape)).astype(jnp.float32)

    z = lambda *s: jnp.zeros(s, jnp.float32)
    o = lambda *s: jnp.ones(s, jnp.float32)

    def gat(in_ch, out_ch):
        hc = heads * out_ch
        return dict(wl=w((in_ch, hc)), bl=z(hc), wr=w((in_ch, hc)), br=z(hc),
                    we=w((outdim, hc)), att=w((heads, out_ch)), bias=z(hc),
                    heads=heads, out_ch=out_ch)

    c1 = 2 * indim // heads
    c2 = outdim // heads
    c4 = 2 * outdim // heads
    c5 = 4 * outdim // heads
    d1, d2, d4, d5 = c1 * heads, c2 * heads, c4 * heads, c5 * heads
    catout = d5 + outdim

    return dict(
        bn0_g=o(indim), bn0_b=z(indim),
        ee_ln_g=o(edge_dim), ee_ln_b=z(edge_dim),
        ee_w1=w((edge_dim, outdim // 2)), ee_b1=z(outdim // 2),
        ee_w2=w((outdim // 2, outdim)), ee_b2=z(outdim),
        ec_w1=w((edge_dim, edge_dim // 2)), ec_b1=z(edge_dim // 2),
        ec_w2=w((edge_dim // 2, 1)), ec_b2=z(1),
        ps_w=w((indim, d1)), ps_b=z(d1),
        gat1=gat(indim, c1), gat2=gat(d1, c2), gat3=gat(d2, c2),
        gat4=gat(d2, c4), gat5=gat(d4, c5),
        ln1_g=o(d1), ln1_b=z(d1), ln2_g=o(d2), ln2_b=z(d2),
        ln3_g=o(d2), ln3_b=z(d2), ln4_g=o(d4), ln4_b=z(d4),
        ln5_g=o(d5), ln5_b=z(d5),
        fp_w=w((d1, d5)), fp_b=z(d5),
        np_w1=w((catout, catout // 2)), np_b1=z(catout // 2),
        np_w2=w((catout // 2, catout // 4)), np_b2=z(catout // 4),
        np_w3=w((catout // 4, 1)), np_b3=z(1),
        skip_weight=jnp.array([0.01], jnp.float32),
        alpha=jnp.array([0.3], jnp.float32),
    )


def gnn_forward(params, x_in, edge_index, edge_attr):
    n_nodes = x_in.shape[0]
    n_edges = edge_index.shape[1]
    src, dst = edge_index[0], edge_index[1]

    # edge-tile size (rows): biggest reasonable tile, multiple of 8 sublanes
    te = min(512, _round_up(n_edges, 8))
    e_pad = _round_up(n_edges, te)

    # padded edges use index == n_nodes -> all-zero one-hot rows (no-op in scatters)
    if e_pad > n_edges:
        fill = jnp.full((e_pad - n_edges,), n_nodes, dtype=src.dtype)
        src_p = jnp.concatenate([src, fill])
        dst_p = jnp.concatenate([dst, fill])
        ea_pad = jnp.concatenate(
            [edge_attr, jnp.zeros((e_pad - n_edges, edge_attr.shape[1]), edge_attr.dtype)], axis=0)
    else:
        src_p, dst_p, ea_pad = src, dst, edge_attr

    # one-hot scatter/gather operands in bf16 (exact 0/1): halves E*N bytes,
    # single-pass bf16 MXU.  No transposed copy is materialized.
    ssrc = jax.nn.one_hot(src_p, n_nodes, dtype=jnp.bfloat16)   # (E_pad, N)
    sdst = jax.nn.one_hot(dst_p, n_nodes, dtype=jnp.bfloat16)   # (E_pad, N)

    # bn0 (batch statistics)
    x = batchnorm(x_in, params["bn0_g"], params["bn0_b"])

    # fused edge encoder (LN->Linear->ReLU->Linear) * classifier gate
    edge_attr_enc = edge_preprocess(ea_pad, params, te)
    if e_pad > n_edges:
        emask = (jnp.arange(e_pad) < n_edges).astype(jnp.float32)[:, None]
        edge_attr_enc = edge_attr_enc * emask

    # GAT stack; LayerNorm + leaky_relu fused into the aggregation epilogue.
    x1, a1 = gatv2_layer(x, params["gat1"], edge_attr_enc, ssrc, sdst,
                         params["ln1_g"], params["ln1_b"], te)
    skip1 = proj_skip(x, params["ps_w"], params["ps_b"], x1, params["skip_weight"])
    x2, a2 = gatv2_layer(skip1, params["gat2"], edge_attr_enc, ssrc, sdst,
                         params["ln2_g"], params["ln2_b"], te)
    x3, a3 = gatv2_layer(x2, params["gat3"], edge_attr_enc, ssrc, sdst,
                         params["ln3_g"], params["ln3_b"], te)
    x4, _ = gatv2_layer(x3, params["gat4"], edge_attr_enc, ssrc, sdst,
                        params["ln4_g"], params["ln4_b"], te)
    x5, _ = gatv2_layer(x4, params["gat5"], edge_attr_enc, ssrc, sdst,
                        params["ln5_g"], params["ln5_b"], te)

    a1, a2, a3 = a1[:n_edges], a2[:n_edges], a3[:n_edges]

    # xf = sigmoid(alpha) * final_proj(x1) + (1 - sigmoid(alpha)) * x5  (fused)
    xmix = final_mix(x1, params["fp_w"], params["fp_b"], x5, params["alpha"])

    # scatter-mean of encoded edge features (degree precomputed once)
    deg = jnp.zeros((n_nodes,), jnp.float32).at[dst].add(1.0)
    inv_deg = (1.0 / jnp.maximum(deg, 1.0)).reshape(n_nodes, 1)
    edge_feats_mean = scatter_mean(sdst, edge_attr_enc, inv_deg, te)

    xf = jnp.concatenate([xmix, edge_feats_mean], axis=1)
    node_probs = node_pred(xf, params)
    return xf, node_probs, a1, a2, a3


if __name__ == "__main__":
    indim, outdim, edge_dim, heads = 16, 32, 8, 4
    n_nodes, n_edges = 8, 16

    key = jax.random.PRNGKey(0)
    k1, k2, k3, k4, kp = jax.random.split(key, 5)
    x_in = jax.random.normal(k1, (n_nodes, indim), jnp.float32)
    src = jax.random.randint(k2, (n_edges,), 0, n_nodes).astype(jnp.int32)
    dst = jax.random.randint(k3, (n_edges,), 0, n_nodes).astype(jnp.int32)
    edge_index = jnp.stack([src, dst], axis=0)
    edge_attr = jax.random.normal(k4, (n_edges, edge_dim), jnp.float32)

    params = init_params(kp, indim, outdim, edge_dim, heads)

    xf, node_probs, a1, a2, a3 = gnn_forward(params, x_in, edge_index, edge_attr)
    jax.block_until_ready((xf, node_probs, a1, a2, a3))

    assert xf.shape == (n_nodes, 4 * outdim // heads * heads + outdim)
    assert node_probs.shape == (n_nodes, 1)
    assert a1.shape == (n_edges, heads) and a2.shape == (n_edges, heads) and a3.shape == (n_edges, heads)
    assert bool(jnp.all(jnp.isfinite(xf))) and bool(jnp.all(jnp.isfinite(node_probs)))
    print("KERNEL_OK")
</pallas_src>

<mosaic_0001>
module attributes {stable_mosaic.version = 11 : i64} {
  func.func @_batchnorm_kernel(%arg0: memref<8x16xf32, #tpu.memory_space<vmem>>, %arg1: memref<1x16xf32, #tpu.memory_space<vmem>>, %arg2: memref<1x16xf32, #tpu.memory_space<vmem>>, %arg3: memref<8x16xf32, #tpu.memory_space<vmem>>) attributes {dimension_semantics = [], scalar_prefetch = 0 : i64, scratch_operands = 0 : i64, tpu.core_type = #tpu.core_type<tc>} {
    %c0 = arith.constant 0 : index
    %c0_0 = arith.constant 0 : index
    %0 = vector.load %arg0[%c0, %c0_0] : memref<8x16xf32, #tpu.memory_space<vmem>>, vector<8x16xf32>
    %cst = arith.constant dense<0.000000e+00> : vector<16xf32>
    %1 = vector.multi_reduction <add>, %0, %cst [0] : vector<8x16xf32> to vector<16xf32>
    %2 = vector.shape_cast %1 : vector<16xf32> to vector<1x16xf32>
    %cst_1 = arith.constant 8.000000e+00 : f32
    %3 = vector.broadcast %cst_1 : f32 to vector<1x16xf32>
    %4 = arith.divf %2, %3 : vector<1x16xf32>
    %5 = vector.broadcast %4 : vector<1x16xf32> to vector<8x16xf32>
    %6 = arith.subf %0, %5 : vector<8x16xf32>
    %7 = arith.mulf %6, %6 : vector<8x16xf32>
    %cst_2 = arith.constant dense<0.000000e+00> : vector<16xf32>
    %8 = vector.multi_reduction <add>, %7, %cst_2 [0] : vector<8x16xf32> to vector<16xf32>
    %9 = vector.shape_cast %8 : vector<16xf32> to vector<1x16xf32>
    %cst_3 = arith.constant 8.000000e+00 : f32
    %10 = vector.broadcast %cst_3 : f32 to vector<1x16xf32>
    %11 = arith.divf %9, %10 : vector<1x16xf32>
    %12 = vector.broadcast %4 : vector<1x16xf32> to vector<8x16xf32>
    %13 = arith.subf %0, %12 : vector<8x16xf32>
    %cst_4 = arith.constant 9.99999974E-6 : f32
    %14 = vector.broadcast %cst_4 : f32 to vector<1x16xf32>
    %15 = arith.addf %11, %14 : vector<1x16xf32>
    %16 = math.rsqrt %15 : vector<1x16xf32>
    %17 = vector.broadcast %16 : vector<1x16xf32> to vector<8x16xf32>
    %18 = arith.mulf %13, %17 : vector<8x16xf32>
    %c0_5 = arith.constant 0 : index
    %c0_6 = arith.constant 0 : index
    %19 = vector.load %arg1[%c0_5, %c0_6] : memref<1x16xf32, #tpu.memory_space<vmem>>, vector<1x16xf32>
    %20 = vector.broadcast %19 : vector<1x16xf32> to vector<8x16xf32>
    %21 = arith.mulf %18, %20 : vector<8x16xf32>
    %c0_7 = arith.constant 0 : index
    %c0_8 = arith.constant 0 : index
    %22 = vector.load %arg2[%c0_7, %c0_8] : memref<1x16xf32, #tpu.memory_space<vmem>>, vector<1x16xf32>
    %23 = vector.broadcast %22 : vector<1x16xf32> to vector<8x16xf32>
    %24 = arith.addf %21, %23 : vector<8x16xf32>
    %c0_9 = arith.constant 0 : index
    %c0_10 = arith.constant 0 : index
    %25 = vector.load %arg3[%c0_9, %c0_10] : memref<8x16xf32, #tpu.memory_space<vmem>>, vector<8x16xf32>
    tpu.vector_store %arg3[%c0_9, %c0_10], %24 {strides = array<i32>} : memref<8x16xf32, #tpu.memory_space<vmem>>, vector<8x16xf32>,
    return
  }
}

</mosaic_0001>

<llo_original>
// kernel: tpu_custom_call.1
$region0: #{tpu_custom_call.1}
  #allocation0 [shape = 'u32[]', space=smem, size = 0x4, offset = 0x4, fixed_abs, tag = 'smem constant byte address 0x4 - core index']
  #allocation1 [shape = 'u32[144,128]{1,0:T(1,128)}', space=vmem, size = 0x12000, scoped, tag = 'internal scratch']
  %s0 = inlined_call_operand.hbm [shape: f32[8,16], index: 0, kind: input, shape index: {}]
  %s1 = inlined_call_operand.vmem [shape: f32[1,16], index: 1, kind: input, shape index: {}]
  %s2 = inlined_call_operand.vmem [shape: f32[1,16], index: 2, kind: input, shape index: {}]
  %s3 = inlined_call_operand.hbm [shape: f32[8,16], index: 3, kind: output, shape index: {}]
  %s4 = sld [smem:[#allocation0]]
  $region26: #{tpu_custom_call.1} parent=0
    _
  %s6 = ssub.s32 1, %s4
  %s7 = scalar_select 0, %s6, %s4
  $region1: #{tpu_custom_call.1} parent=0
    #allocation2 [shape = 'u8[4096]{0}', space=vmem, size = 0x1000, scoped, tag = 'input window, operand 0, single buffered']
    #allocation3 [shape = 's32[1]{0}', space=sflag, size = 0x4, scoped, tag = 'scoped memory for tpu_custom_call.1']
    #allocation4 [shape = 's32[1]{0}', space=sflag, size = 0x4, scoped, tag = 'scoped memory for tpu_custom_call.1']
    #allocation5 [shape = 'u8[4096]{0}', space=vmem, size = 0x1000, scoped, tag = 'output window, operand 0, single buffered']
    %8 = vsyncpa [#allocation3], 0
    %9 = vsyncpa [#allocation4], 0
    // Predicated region
    $region2: #{tpu_custom_call.1} parent=1 // pred_check
      _
    $region3: #{tpu_custom_call.1} parent=1 // pred_check_branch
      %11 = sbr.rel (0) target = $region5
    $region4: #{tpu_custom_call.1} parent=1 // pred_region
      %s13 = ssub.s32 128, 128
      %14 = vsyncadd [#allocation3], %s13
      %s16 = sshll.u32 [#allocation2], 4
      %s17 = int_to_ptr.vmem [resolvable:$true] %s16
      %19 = dma.hbm_to_vmem [thread:$0]  %s0, 128, %s17, [#allocation3]
    $region5: #{tpu_custom_call.1} parent=1 // pred_fallthru
      _
    // Predicated region
    $region6: #{tpu_custom_call.1} parent=1 // pred_check
      _
    $region7: #{tpu_custom_call.1} parent=1 // pred_check_branch
      %21 = sbr.rel (0) target = $region9
    $region8: #{tpu_custom_call.1} parent=1 // pred_region
      _
    $region9: #{tpu_custom_call.1} parent=1 // pred_fallthru
      _
    // Predicated region
    $region10: #{tpu_custom_call.1} parent=1 // pred_check
      _
    $region11: #{tpu_custom_call.1} parent=1 // pred_check_branch
      %23 = sbr.rel (0) target = $region13
    $region12: #{tpu_custom_call.1} parent=1 // pred_region
      _
    $region13: #{tpu_custom_call.1} parent=1 // pred_fallthru
      _
    // Predicated region
    $region14: #{tpu_custom_call.1} parent=1 // pred_check
      _
    $region15: #{tpu_custom_call.1} parent=1 // pred_check_branch
      %25 = sbr.rel (0) target = $region17
    $region16: #{tpu_custom_call.1} parent=1 // pred_region
      %26 = dma.done [#allocation3], 128
    $region17: #{tpu_custom_call.1} parent=1 // pred_fallthru
      _
    %v27 = vld [vmem:[#allocation2] sm:$0xff]
    %vm28 = vcmask 130048
    %v29 = vsel %vm28, %v27, 0.0
    %v30 = vrot.slane %v29, 4
    %v31 = vadd.f32 %v29, %v30
    %v32 = vrot.slane %v31, 2
    %v33 = vadd.f32 %v31, %v32
    %v34 = vrot.slane %v33, 1
    %v35 = vadd.f32 %v33, %v34
    %v36 = vrcp.pop 8.0
    %v37 = vmul.f32 %v35, %v36
    %v38 = vsub.f32 %v27, %v37
    %v39 = vmul.f32 %v38, %v38
    %v40 = vsel %vm28, %v39, 0.0
    %v41 = vrot.slane %v40, 4
    %v42 = vadd.f32 %v40, %v41
    %v43 = vrot.slane %v42, 2
    %v44 = vadd.f32 %v42, %v43
    %v45 = vrot.slane %v44, 1
    %v46 = vadd.f32 %v44, %v45
    %v47 = vmul.f32 %v46, %v36
    %v48 = vadd.f32 %v47, 1e-05
    %v49 = vrsqrt.pop %v48
    %v50 = vmul.f32 %v38, %v49
    %v51 = vld [vmem:[%s1] sm:$0x1]
    %v53 = vlaneseq
    %v54 = vshrl.u32 %v53, 7
    %v55 = vsub.s32 0, %v54
    %v56 = vrot.slane %v51, %v55
    %v58 = vmul.f32 %v50, %v56
    %v59 = vld [vmem:[%s2] sm:$0x1]
    %v61 = vlaneseq
    %v62 = vshrl.u32 %v61, 7
    %v63 = vsub.s32 0, %v62
    %v64 = vrot.slane %v59, %v63
    %v66 = vadd.f32 %v58, %v64
    %67 = vst.msk [vmem:[#allocation5] sm:$0xff] %vm28, %v66
    // Predicated region
    $region18: #{tpu_custom_call.1} parent=1 // pred_check
      _
    $region19: #{tpu_custom_call.1} parent=1 // pred_check_branch
      %69 = sbr.rel (0) target = $region21
    $region20: #{tpu_custom_call.1} parent=1 // pred_region
      %s71 = ssub.s32 128, 128
      %72 = vsyncadd [#allocation4], %s71
      %s74 = sshll.u32 [#allocation5], 4
      %s75 = int_to_ptr.vmem [resolvable:$true] %s74
      %77 = dma.vmem_to_hbm [thread:$0]  %s75, 128, %s3, [#allocation4]
    $region21: #{tpu_custom_call.1} parent=1 // pred_fallthru
      _
    // Predicated region
    $region22: #{tpu_custom_call.1} parent=1 // pred_check
      _
    $region23: #{tpu_custom_call.1} parent=1 // pred_check_branch
      %79 = sbr.rel (0) target = $region25
    $region24: #{tpu_custom_call.1} parent=1 // pred_region
      %80 = dma.done [#allocation4], 128
    $region25: #{tpu_custom_call.1} parent=1 // pred_fallthru
      _
    %81 = vsyncpa [#allocation3], 1
    %82 = vsyncpa [#allocation4], 1

</llo_original>
